<compile_context>
chip_gen: v5e
topology: v5e:2x2
jax: 0.10.0
libtpu: 0.0.40
codegen_flags: <defaults>
</compile_context>

<pallas_src>
from functools import partial

import jax
import jax.numpy as jnp
from jax.experimental import pallas as pl
from jax.experimental.pallas import tpu as pltpu

LANE = 128


def _round_up(x, m):
    return ((x + m - 1) // m) * m


def _choose_tiles(n):
    """Pick power-of-two tiles (multiples of 128) and the padded node count."""
    n_min = _round_up(n, LANE)
    tm = 256 if n_min >= 256 else 128
    tk = 512 if n_min >= 512 else (256 if n_min >= 256 else 128)
    n_pad = _round_up(n, max(tm, tk))  # tm, tk are powers of two -> both divide n_pad
    return tm, tk, n_pad


# ---------------------------------------------------------------------------
# Pallas kernel: one SAGEConv layer, tiled over (row tiles, contraction tiles).
# ---------------------------------------------------------------------------
def sage_layer_kernel(a_ref, xk_ref, xi_ref, wl_ref, wr_ref, b_ref, o_ref,
                      acc_ref, *, apply_relu):
    k = pl.program_id(1)

    @pl.when(k == 0)
    def _():
        acc_ref[...] = jnp.zeros_like(acc_ref)

    # Mean-aggregation partial sum: (TM, TK)bf16 @ (TK, Fp)bf16 -> f32 acc.
    acc_ref[...] += jnp.dot(a_ref[...], xk_ref[...],
                            preferred_element_type=jnp.float32)

    @pl.when(k == pl.num_programs(1) - 1)
    def _():
        # Fused projection + bias (+ ReLU): agg @ W_l + x_i @ W_r + b.
        out = jnp.dot(acc_ref[...], wl_ref[...],
                      preferred_element_type=jnp.float32)
        out = out + jnp.dot(xi_ref[...].astype(jnp.float32), wr_ref[...],
                            preferred_element_type=jnp.float32)
        out = out + b_ref[...]
        if apply_relu:
            out = jnp.maximum(out, 0.0)
        o_ref[...] = out.astype(o_ref.dtype)


def sage_layer(A, x, W_l, W_r, b, *, apply_relu, tm, tk, out_dtype):
    """A: (Np, Np) bf16 mean-normalized adjacency (zero-padded).
       x: (Np, Fp_in) bf16 node features (zero-padded).
       W_l/W_r: (Fp_in, Fp_out) f32.  b: (1, Fp_out) f32."""
    n_pad = A.shape[0]
    fp_in = x.shape[1]
    fp_out = W_l.shape[1]
    grid = (n_pad // tm, n_pad // tk)

    return pl.pallas_call(
        partial(sage_layer_kernel, apply_relu=apply_relu),
        out_shape=jax.ShapeDtypeStruct((n_pad, fp_out), out_dtype),
        grid_spec=pltpu.PrefetchScalarGridSpec(
            num_scalar_prefetch=0,
            grid=grid,
            in_specs=[
                pl.BlockSpec((tm, tk), lambda i, k: (i, k)),             # A tile
                pl.BlockSpec((tk, fp_in), lambda i, k: (k, 0)),          # x (agg RHS)
                pl.BlockSpec((tm, fp_in), lambda i, k: (i, 0)),          # x (self rows)
                pl.BlockSpec((fp_in, fp_out), lambda i, k: (0, 0)),      # W_l (resident)
                pl.BlockSpec((fp_in, fp_out), lambda i, k: (0, 0)),      # W_r (resident)
                pl.BlockSpec((1, fp_out), lambda i, k: (0, 0)),          # bias (resident)
            ],
            out_specs=pl.BlockSpec((tm, fp_out), lambda i, k: (i, 0)),
            scratch_shapes=[pltpu.VMEM((tm, fp_in), jnp.float32)],
        ),
        compiler_params=pltpu.CompilerParams(
            dimension_semantics=("parallel", "arbitrary")),
    )(A, x, x, W_l, W_r, b)


# ---------------------------------------------------------------------------
# Plain-JAX glue: dense mean-normalized adjacency + parameter packing/padding.
# ---------------------------------------------------------------------------
def build_mean_adj(edge_index, num_nodes, padded_nodes):
    src = edge_index[0]  # message source j
    dst = edge_index[1]  # message target i
    A = jnp.zeros((num_nodes, num_nodes), jnp.float32).at[dst, src].add(1.0)
    deg = jnp.maximum(jnp.sum(A, axis=1, keepdims=True), 1.0)
    A = A / deg
    pad = padded_nodes - num_nodes
    A = jnp.pad(A, ((0, pad), (0, pad)))
    return A.astype(jnp.bfloat16)


def _pack_layer_params(W_l, W_r, b):
    """Zero-pad weights/bias to 128-lane multiples (lane-dense MXU tiles)."""
    fin, fout = W_l.shape
    fp_in = _round_up(fin, LANE)
    fp_out = _round_up(fout, LANE)
    Wl = jnp.zeros((fp_in, fp_out), jnp.float32).at[:fin, :fout].set(W_l)
    Wr = jnp.zeros((fp_in, fp_out), jnp.float32).at[:fin, :fout].set(W_r)
    bp = jnp.zeros((1, fp_out), jnp.float32).at[0, :fout].set(b)
    return Wl, Wr, bp, fp_in, fp_out


def init_params(key, in_channels, hidden_channels, out_channels, num_layers=2):
    dims = [in_channels] + [hidden_channels] * (num_layers - 1) + [out_channels]
    params = []
    for li in range(num_layers):
        fin, fout = dims[li], dims[li + 1]
        key, k1, k2, k3 = jax.random.split(key, 4)
        scale = 1.0 / jnp.sqrt(jnp.float32(fin))
        # stored as (Fin, Fout) so the kernel computes x @ W
        W_l = jax.random.uniform(k1, (fin, fout), jnp.float32, -scale, scale)
        W_r = jax.random.uniform(k2, (fin, fout), jnp.float32, -scale, scale)
        b = jax.random.uniform(k3, (fout,), jnp.float32, -scale, scale)
        params.append((W_l, W_r, b))
    return params


def pyg_sage_forward(params, x, edge_index):
    N, fin0 = x.shape
    out_channels = params[-1][0].shape[1]
    tm, tk, n_pad = _choose_tiles(N)
    A = build_mean_adj(edge_index, N, n_pad)

    # Pad nodes + feature lanes once; padded rows/cols are exact zeros so they
    # never contaminate real nodes and are sliced off at the end.
    h = jnp.pad(x, ((0, n_pad - N), (0, _round_up(fin0, LANE) - fin0)))

    num_layers = len(params)
    for i, (W_l, W_r, b) in enumerate(params):
        Wl, Wr, bp, fp_in, fp_out = _pack_layer_params(W_l, W_r, b)
        assert h.shape[1] == fp_in
        last = (i == num_layers - 1)
        h = sage_layer(A, h.astype(jnp.bfloat16), Wl, Wr, bp,
                       apply_relu=not last, tm=tm, tk=tk,
                       out_dtype=jnp.float32 if last else jnp.bfloat16)
        # dropout(p=0.5): identity in eval mode
    return h[:N, :out_channels]


# ---------------------------------------------------------------------------
# Pure-JAX reference (f32, dense) for a correctness sanity check.
# ---------------------------------------------------------------------------
def pyg_sage_reference(params, x, edge_index):
    N = x.shape[0]
    src, dst = edge_index[0], edge_index[1]
    A = jnp.zeros((N, N), jnp.float32).at[dst, src].add(1.0)
    A = A / jnp.maximum(A.sum(axis=1, keepdims=True), 1.0)
    h = x
    for i, (W_l, W_r, b) in enumerate(params):
        h = (A @ h) @ W_l + h @ W_r + b
        if i < len(params) - 1:
            h = jnp.maximum(h, 0.0)
    return h


# ---------------------------------------------------------------------------
if __name__ == "__main__":
    key = jax.random.PRNGKey(0)

    N = 64            # number of nodes
    E = 256           # number of edges
    in_channels = 32
    hidden_channels = 64
    out_channels = 16
    num_layers = 2

    kx, ke, kp = jax.random.split(key, 3)
    x = jax.random.normal(kx, (N, in_channels), jnp.float32)
    edge_index = jax.random.randint(ke, (2, E), 0, N, dtype=jnp.int32)

    params = init_params(kp, in_channels, hidden_channels, out_channels, num_layers)

    out = pyg_sage_forward(params, x, edge_index)
    out = jax.block_until_ready(out)

    assert out.shape == (N, out_channels), out.shape
    assert jnp.all(jnp.isfinite(out))

    ref = pyg_sage_reference(params, x, edge_index)
    err = jnp.max(jnp.abs(out - ref))
    # A/x/activations are streamed in bf16 (f32 accumulation, f32 weights)
    # -> small, bounded mismatch vs the all-f32 reference.
    assert err < 5e-2, f"max abs err vs f32 reference: {err}"

    print("KERNEL_OK")
</pallas_src>

<mosaic_0001>
module attributes {stable_mosaic.version = 11 : i64} {
  func.func @sage_layer_kernel(%arg0: i32, %arg1: i32, %arg2: memref<128x128xbf16, #tpu.memory_space<vmem>>, %arg3: memref<128x128xbf16, #tpu.memory_space<vmem>>, %arg4: memref<128x128xbf16, #tpu.memory_space<vmem>>, %arg5: memref<128x128xf32, #tpu.memory_space<vmem>>, %arg6: memref<128x128xf32, #tpu.memory_space<vmem>>, %arg7: memref<1x128xf32, #tpu.memory_space<vmem>>, %arg8: memref<128x128xbf16, #tpu.memory_space<vmem>>, %arg9: memref<128x128xf32, #tpu.memory_space<vmem>>) attributes {dimension_semantics = [#tpu.dimension_semantics<parallel>, #tpu.dimension_semantics<arbitrary>], iteration_bounds = array<i64: 1, 1>, scalar_prefetch = 0 : i64, scratch_operands = 1 : i64, tpu.core_type = #tpu.core_type<tc>, window_params = [{transform_indices = @transform_0, window_bounds = array<i64: 128, 128>}, {transform_indices = @transform_1, window_bounds = array<i64: 128, 128>}, {transform_indices = @transform_2, window_bounds = array<i64: 128, 128>}, {pipeline_mode = #tpu.pipeline_mode<synchronous>, transform_indices = @transform_3, window_bounds = array<i64: 128, 128>}, {pipeline_mode = #tpu.pipeline_mode<synchronous>, transform_indices = @transform_4, window_bounds = array<i64: 128, 128>}, {pipeline_mode = #tpu.pipeline_mode<synchronous>, transform_indices = @transform_5, window_bounds = array<i64: 1, 128>}, {transform_indices = @transform_6, window_bounds = array<i64: 128, 128>}]} {
    %c0_i32 = arith.constant 0 : i32
    %0 = arith.cmpi eq, %arg1, %c0_i32 : i32
    %1 = arith.extui %0 : i1 to i32
    %c0_i32_0 = arith.constant 0 : i32
    %2 = arith.cmpi ne, %1, %c0_i32_0 : i32
    scf.if %2 {
      %cst_10 = arith.constant 0.000000e+00 : f32
      %12 = vector.broadcast %cst_10 : f32 to vector<128x128xf32>
      %c0_11 = arith.constant 0 : index
      %c0_12 = arith.constant 0 : index
      %13 = vector.load %arg9[%c0_11, %c0_12] : memref<128x128xf32, #tpu.memory_space<vmem>>, vector<128x128xf32>
      tpu.vector_store %arg9[%c0_11, %c0_12], %12 {strides = array<i32>} : memref<128x128xf32, #tpu.memory_space<vmem>>, vector<128x128xf32>,
    } else {
    }
    %c0 = arith.constant 0 : index
    %c0_1 = arith.constant 0 : index
    %3 = vector.load %arg9[%c0, %c0_1] : memref<128x128xf32, #tpu.memory_space<vmem>>, vector<128x128xf32>
    %c0_2 = arith.constant 0 : index
    %c0_3 = arith.constant 0 : index
    %4 = vector.load %arg2[%c0_2, %c0_3] : memref<128x128xbf16, #tpu.memory_space<vmem>>, vector<128x128xbf16>
    %c0_4 = arith.constant 0 : index
    %c0_5 = arith.constant 0 : index
    %5 = vector.load %arg3[%c0_4, %c0_5] : memref<128x128xbf16, #tpu.memory_space<vmem>>, vector<128x128xbf16>
    %cst = arith.constant dense<0.000000e+00> : vector<128x128xf32>
    %6 = tpu.matmul %4, %5, %cst {dimension_numbers = #tpu.dot_dimension_numbers<[1], [0], [0], [1], [0, 0, 1, 1], [], []>} : vector<128x128xbf16>, vector<128x128xbf16>, vector<128x128xf32> -> vector<128x128xf32>
    %7 = arith.addf %3, %6 : vector<128x128xf32>
    %c0_6 = arith.constant 0 : index
    %c0_7 = arith.constant 0 : index
    %8 = vector.load %arg9[%c0_6, %c0_7] : memref<128x128xf32, #tpu.memory_space<vmem>>, vector<128x128xf32>
    tpu.vector_store %arg9[%c0_6, %c0_7], %7 {strides = array<i32>} : memref<128x128xf32, #tpu.memory_space<vmem>>, vector<128x128xf32>,
    %c0_i32_8 = arith.constant 0 : i32
    %9 = arith.cmpi eq, %arg1, %c0_i32_8 : i32
    %10 = arith.extui %9 : i1 to i32
    %c0_i32_9 = arith.constant 0 : i32
    %11 = arith.cmpi ne, %10, %c0_i32_9 : i32
    scf.if %11 {
      %c0_10 = arith.constant 0 : index
      %c0_11 = arith.constant 0 : index
      %12 = vector.load %arg9[%c0_10, %c0_11] : memref<128x128xf32, #tpu.memory_space<vmem>>, vector<128x128xf32>
      %c0_12 = arith.constant 0 : index
      %c0_13 = arith.constant 0 : index
      %13 = vector.load %arg5[%c0_12, %c0_13] : memref<128x128xf32, #tpu.memory_space<vmem>>, vector<128x128xf32>
      %cst_14 = arith.constant dense<0.000000e+00> : vector<128x128xf32>
      %14 = tpu.matmul %12, %13, %cst_14 {dimension_numbers = #tpu.dot_dimension_numbers<[1], [0], [0], [1], [0, 0, 1, 1], [], []>} : vector<128x128xf32>, vector<128x128xf32>, vector<128x128xf32> -> vector<128x128xf32>
      %c0_15 = arith.constant 0 : index
      %c0_16 = arith.constant 0 : index
      %15 = vector.load %arg4[%c0_15, %c0_16] : memref<128x128xbf16, #tpu.memory_space<vmem>>, vector<128x128xbf16>
      %16 = arith.extf %15 : vector<128x128xbf16> to vector<128x128xf32>
      %c0_17 = arith.constant 0 : index
      %c0_18 = arith.constant 0 : index
      %17 = vector.load %arg6[%c0_17, %c0_18] : memref<128x128xf32, #tpu.memory_space<vmem>>, vector<128x128xf32>
      %cst_19 = arith.constant dense<0.000000e+00> : vector<128x128xf32>
      %18 = tpu.matmul %16, %17, %cst_19 {dimension_numbers = #tpu.dot_dimension_numbers<[1], [0], [0], [1], [0, 0, 1, 1], [], []>} : vector<128x128xf32>, vector<128x128xf32>, vector<128x128xf32> -> vector<128x128xf32>
      %19 = arith.addf %14, %18 : vector<128x128xf32>
      %c0_20 = arith.constant 0 : index
      %c0_21 = arith.constant 0 : index
      %20 = vector.load %arg7[%c0_20, %c0_21] : memref<1x128xf32, #tpu.memory_space<vmem>>, vector<1x128xf32>
      %21 = vector.broadcast %20 : vector<1x128xf32> to vector<128x128xf32>
      %22 = arith.addf %19, %21 : vector<128x128xf32>
      %cst_22 = arith.constant 0.000000e+00 : f32
      %23 = vector.broadcast %cst_22 : f32 to vector<128x128xf32>
      %24 = arith.maximumf %22, %23 : vector<128x128xf32>
      %25 = arith.truncf %24 : vector<128x128xf32> to vector<128x128xbf16>
      %c0_23 = arith.constant 0 : index
      %c0_24 = arith.constant 0 : index
      %26 = vector.load %arg8[%c0_23, %c0_24] : memref<128x128xbf16, #tpu.memory_space<vmem>>, vector<128x128xbf16>
      tpu.vector_store %arg8[%c0_23, %c0_24], %25 {strides = array<i32>} : memref<128x128xbf16, #tpu.memory_space<vmem>>, vector<128x128xbf16>,
    } else {
    }
    return
  }
  func.func @transform_0(%arg0: i32, %arg1: i32) -> (i32, i32) {
    %c0_i32 = arith.constant 0 : i32
    return %arg0, %arg1 : i32, i32
  }
  func.func @transform_1(%arg0: i32, %arg1: i32) -> (i32, i32) {
    %c0_i32 = arith.constant 0 : i32
    %c0_i32_0 = arith.constant 0 : i32
    return %arg1, %c0_i32 : i32, i32
  }
  func.func @transform_2(%arg0: i32, %arg1: i32) -> (i32, i32) {
    %c0_i32 = arith.constant 0 : i32
    %c0_i32_0 = arith.constant 0 : i32
    return %arg0, %c0_i32 : i32, i32
  }
  func.func @transform_3(%arg0: i32, %arg1: i32) -> (i32, i32) {
    %c0_i32 = arith.constant 0 : i32
    %c0_i32_0 = arith.constant 0 : i32
    %c0_i32_1 = arith.constant 0 : i32
    return %c0_i32, %c0_i32_0 : i32, i32
  }
  func.func @transform_4(%arg0: i32, %arg1: i32) -> (i32, i32) {
    %c0_i32 = arith.constant 0 : i32
    %c0_i32_0 = arith.constant 0 : i32
    %c0_i32_1 = arith.constant 0 : i32
    return %c0_i32, %c0_i32_0 : i32, i32
  }
  func.func @transform_5(%arg0: i32, %arg1: i32) -> (i32, i32) {
    %c0_i32 = arith.constant 0 : i32
    %c0_i32_0 = arith.constant 0 : i32
    %c0_i32_1 = arith.constant 0 : i32
    return %c0_i32, %c0_i32_0 : i32, i32
  }
  func.func @transform_6(%arg0: i32, %arg1: i32) -> (i32, i32) {
    %c0_i32 = arith.constant 0 : i32
    %c0_i32_0 = arith.constant 0 : i32
    return %arg0, %c0_i32 : i32, i32
  }
}

</mosaic_0001>

<llo_original>
// kernel: tpu_custom_call.1
$region0: #{tpu_custom_call.1}
  #allocation0 [shape = 'u32[]', space=smem, size = 0x4, offset = 0x4, fixed_abs, tag = 'smem constant byte address 0x4 - core index']
  #allocation1 [shape = 'u32[72,128]{1,0:T(1,128)}', space=vmem, size = 0x9000, scoped, tag = 'internal scratch']
  #allocation2 [shape = 'f32[128,128]{1,0:T(8,128)}', space=vmem, size = 0x10000, scoped, tag = 'scratch operand']
  %s0 = inlined_call_operand.hbm [shape: bf16[128,128], index: 0, kind: input, shape index: {}]
  %s1 = inlined_call_operand.hbm [shape: bf16[128,128], index: 1, kind: input, shape index: {}]
  %s2 = inlined_call_operand.hbm [shape: bf16[128,128], index: 2, kind: input, shape index: {}]
  %s3 = inlined_call_operand.hbm [shape: f32[128,128], index: 3, kind: input, shape index: {}]
  %s4 = inlined_call_operand.hbm [shape: f32[128,128], index: 4, kind: input, shape index: {}]
  %s5 = inlined_call_operand.vmem [shape: f32[1,128], index: 5, kind: input, shape index: {}]
  %s6 = inlined_call_operand.hbm [shape: bf16[128,128], index: 6, kind: output, shape index: {}]
  %s7 = sld [smem:[#allocation0]]
  $region62: #{tpu_custom_call.1} parent=0
    _
  %s9 = ssub.s32 1, %s7
  %s10 = scalar_select 0, %s9, %s7
  $region1: #{tpu_custom_call.1} parent=0
    #allocation3 [shape = 'u8[32768]{0}', space=vmem, size = 0x8000, scoped, tag = 'input window, operand 0, single buffered']
    #allocation4 [shape = 's32[1]{0}', space=sflag, size = 0x4, scoped, tag = 'scoped memory for tpu_custom_call.1']
    #allocation5 [shape = 's32[1]{0}', space=sflag, size = 0x4, scoped, tag = 'scoped memory for tpu_custom_call.1']
    #allocation6 [shape = 'u8[32768]{0}', space=vmem, size = 0x8000, scoped, tag = 'input window, operand 1, single buffered']
    #allocation7 [shape = 's32[1]{0}', space=sflag, size = 0x4, scoped, tag = 'scoped memory for tpu_custom_call.1']
    #allocation8 [shape = 'u8[32768]{0}', space=vmem, size = 0x8000, scoped, tag = 'input window, operand 2, single buffered']
    #allocation9 [shape = 'u8[65536]{0}', space=vmem, size = 0x10000, scoped, tag = 'input window, operand 3, single buffered']
    #allocation10 [shape = 's32[1]{0}', space=sflag, size = 0x4, scoped, tag = 'scoped memory for tpu_custom_call.1']
    #allocation11 [shape = 'u8[65536]{0}', space=vmem, size = 0x10000, scoped, tag = 'input window, operand 4, single buffered']
    #allocation12 [shape = 'u8[32768]{0}', space=vmem, size = 0x8000, scoped, tag = 'output window, operand 0, single buffered']
    %11 = vsyncpa [#allocation4], 0
    %12 = vsyncpa [#allocation7], 0
    %13 = vsyncpa [#allocation10], 0
    %14 = vsyncpa [#allocation5], 0
    // Predicated region
    $region2: #{tpu_custom_call.1} parent=1 // pred_check
      _
    $region3: #{tpu_custom_call.1} parent=1 // pred_check_branch
      %16 = sbr.rel (0) target = $region5
    $region4: #{tpu_custom_call.1} parent=1 // pred_region
      %18 = vsyncadd [#allocation4], 0
      %s19 = sshll.u32 %s0, 4
      %s20 = int_to_ptr.hbm [resolvable:$true] %s19
      %s21 = sshll.u32 [#allocation3], 4
      %s22 = int_to_ptr.vmem [resolvable:$true] %s21
      %27 = dma.hbm_to_vmem [thread:$0]  %s20, 1024, %s22, [#allocation4], 64, 64, 4
    $region5: #{tpu_custom_call.1} parent=1 // pred_fallthru
      _
    // Predicated region
    $region6: #{tpu_custom_call.1} parent=1 // pred_check
      _
    $region7: #{tpu_custom_call.1} parent=1 // pred_check_branch
      %29 = sbr.rel (0) target = $region9
    $region8: #{tpu_custom_call.1} parent=1 // pred_region
      %31 = vsyncadd [#allocation7], 0
      %s32 = sshll.u32 %s1, 4
      %s33 = int_to_ptr.hbm [resolvable:$true] %s32
      %s34 = sshll.u32 [#allocation6], 4
      %s35 = int_to_ptr.vmem [resolvable:$true] %s34
      %40 = dma.hbm_to_vmem [thread:$0]  %s33, 1024, %s35, [#allocation7], 64, 64, 4
    $region9: #{tpu_custom_call.1} parent=1 // pred_fallthru
      _
    // Predicated region
    $region10: #{tpu_custom_call.1} parent=1 // pred_check
      _
    $region11: #{tpu_custom_call.1} parent=1 // pred_check_branch
      %42 = sbr.rel (0) target = $region13
    $region12: #{tpu_custom_call.1} parent=1 // pred_region
      %44 = vsyncadd [#allocation7], 0
      %s45 = sshll.u32 %s2, 4
      %s46 = int_to_ptr.hbm [resolvable:$true] %s45
      %s47 = sshll.u32 [#allocation8], 4
      %s48 = int_to_ptr.vmem [resolvable:$true] %s47
      %53 = dma.hbm_to_vmem [thread:$0]  %s46, 1024, %s48, [#allocation7], 64, 64, 4
    $region13: #{tpu_custom_call.1} parent=1 // pred_fallthru
      _
    // Predicated region
    $region14: #{tpu_custom_call.1} parent=1 // pred_check
      _
    $region15: #{tpu_custom_call.1} parent=1 // pred_check_branch
      %55 = sbr.rel (0) target = $region17
    $region16: #{tpu_custom_call.1} parent=1 // pred_region
      %57 = vsyncadd [#allocation10], 0
      %s58 = sshll.u32 %s3, 4
      %s59 = int_to_ptr.hbm [resolvable:$true] %s58
      %s60 = sshll.u32 [#allocation9], 4
      %s61 = int_to_ptr.vmem [resolvable:$true] %s60
      %66 = dma.hbm_to_vmem [thread:$0]  %s59, 2048, %s61, [#allocation10], 128, 128, 8
    $region17: #{tpu_custom_call.1} parent=1 // pred_fallthru
      _
    // Predicated region
    $region18: #{tpu_custom_call.1} parent=1 // pred_check
      _
    $region19: #{tpu_custom_call.1} parent=1 // pred_check_branch
      %68 = sbr.rel (0) target = $region21
    $region20: #{tpu_custom_call.1} parent=1 // pred_region
      %70 = vsyncadd [#allocation10], 0
      %s71 = sshll.u32 %s4, 4
      %s72 = int_to_ptr.hbm [resolvable:$true] %s71
      %s73 = sshll.u32 [#allocation11], 4
      %s74 = int_to_ptr.vmem [resolvable:$true] %s73
      %79 = dma.hbm_to_vmem [thread:$0]  %s72, 2048, %s74, [#allocation10], 128, 128, 8
    $region21: #{tpu_custom_call.1} parent=1 // pred_fallthru
      _
    // Predicated region
    $region22: #{tpu_custom_call.1} parent=1 // pred_check
      _
    $region23: #{tpu_custom_call.1} parent=1 // pred_check_branch
      %81 = sbr.rel (0) target = $region25
    $region24: #{tpu_custom_call.1} parent=1 // pred_region
      _
    $region25: #{tpu_custom_call.1} parent=1 // pred_fallthru
      _
    // Predicated region
    $region26: #{tpu_custom_call.1} parent=1 // pred_check
      _
    $region27: #{tpu_custom_call.1} parent=1 // pred_check_branch
      %83 = sbr.rel (0) target = $region29
    $region28: #{tpu_custom_call.1} parent=1 // pred_region
      %85 = dma.done [#allocation4], 1024
    $region29: #{tpu_custom_call.1} parent=1 // pred_fallthru
      _
    // Predicated region
    $region30: #{tpu_custom_call.1} parent=1 // pred_check
      _
    $region31: #{tpu_custom_call.1} parent=1 // pred_check_branch
      %87 = sbr.rel (0) target = $region33
    $region32: #{tpu_custom_call.1} parent=1 // pred_region
      %89 = dma.done [#allocation7], 1024
    $region33: #{tpu_custom_call.1} parent=1 // pred_fallthru
      _
    // Predicated region
    $region34: #{tpu_custom_call.1} parent=1 // pred_check
      _
    $region35: #{tpu_custom_call.1} parent=1 // pred_check_branch
      %91 = sbr.rel (0) target = $region37
    $region36: #{tpu_custom_call.1} parent=1 // pred_region
      %93 = dma.done [#allocation7], 1024
    $region37: #{tpu_custom_call.1} parent=1 // pred_fallthru
      _
    // Predicated region
    $region38: #{tpu_custom_call.1} parent=1 // pred_check
      _
    $region39: #{tpu_custom_call.1} parent=1 // pred_check_branch
      %95 = sbr.rel (0) target = $region41
    $region40: #{tpu_custom_call.1} parent=1 // pred_region
      %97 = dma.done [#allocation10], 2048
    $region41: #{tpu_custom_call.1} parent=1 // pred_fallthru
      _
    // Predicated region
    $region42: #{tpu_custom_call.1} parent=1 // pred_check
      _
    $region43: #{tpu_custom_call.1} parent=1 // pred_check_branch
      %99 = sbr.rel (0) target = $region45
    $region44: #{tpu_custom_call.1} parent=1 // pred_region
      %101 = dma.done [#allocation10], 2048
    $region45: #{tpu_custom_call.1} parent=1 // pred_fallthru
      _
    %p102 = scmp.eq.s32.totalorder 0, 0
    // Predicated region
    $region46: #{tpu_custom_call.1} parent=1 // pred_check
      %p103 = pneg %p102
    $region47: #{tpu_custom_call.1} parent=1 // pred_check_branch
      %105 = sbr.rel (%p103) target = $region49
    $region48: #{tpu_custom_call.1} parent=1 // pred_region
      %106 = vst [vmem:[#allocation2] sm:$0xff] 0.0
      %107 = vst [vmem:[#allocation2 + $0x8] sm:$0xff] 0.0
      %108 = vst [vmem:[#allocation2 + $0x10] sm:$0xff] 0.0
      %109 = vst [vmem:[#allocation2 + $0x18] sm:$0xff] 0.0
      %110 = vst [vmem:[#allocation2 + $0x20] sm:$0xff] 0.0
      %111 = vst [vmem:[#allocation2 + $0x28] sm:$0xff] 0.0
      %112 = vst [vmem:[#allocation2 + $0x30] sm:$0xff] 0.0
      %113 = vst [vmem:[#allocation2 + $0x38] sm:$0xff] 0.0
      %114 = vst [vmem:[#allocation2 + $0x40] sm:$0xff] 0.0
      %115 = vst [vmem:[#allocation2 + $0x48] sm:$0xff] 0.0
      %116 = vst [vmem:[#allocation2 + $0x50] sm:$0xff] 0.0
      %117 = vst [vmem:[#allocation2 + $0x58] sm:$0xff] 0.0
      %118 = vst [vmem:[#allocation2 + $0x60] sm:$0xff] 0.0
      %119 = vst [vmem:[#allocation2 + $0x68] sm:$0xff] 0.0
      %120 = vst [vmem:[#allocation2 + $0x70] sm:$0xff] 0.0
      %121 = vst [vmem:[#allocation2 + $0x78] sm:$0xff] 0.0
    $region49: #{tpu_custom_call.1} parent=1 // pred_fallthru
      _
    %v122 = vld [vmem:[#allocation2] sm:$0xff]
    %v123 = vld [vmem:[#allocation2 + $0x8] sm:$0xff]
    %v124 = vld [vmem:[#allocation2 + $0x10] sm:$0xff]
    %v125 = vld [vmem:[#allocation2 + $0x18] sm:$0xff]
    %v126 = vld [vmem:[#allocation2 + $0x20] sm:$0xff]
    %v127 = vld [vmem:[#allocation2 + $0x28] sm:$0xff]
    %v128 = vld [vmem:[#allocation2 + $0x30] sm:$0xff]
    %v129 = vld [vmem:[#allocation2 + $0x38] sm:$0xff]
    %v130 = vld [vmem:[#allocation2 + $0x40] sm:$0xff]
    %v131 = vld [vmem:[#allocation2 + $0x48] sm:$0xff]
    %v132 = vld [vmem:[#allocation2 + $0x50] sm:$0xff]
    %v133 = vld [vmem:[#allocation2 + $0x58] sm:$0xff]
    %v134 = vld [vmem:[#allocation2 + $0x60] sm:$0xff]
    %v135 = vld [vmem:[#allocation2 + $0x68] sm:$0xff]
    %v136 = vld [vmem:[#allocation2 + $0x70] sm:$0xff]
    %v137 = vld [vmem:[#allocation2 + $0x78] sm:$0xff]
    %v138 = vld [vmem:[#allocation3] sm:$0xf]
    %v139 = vld [vmem:[#allocation3 + $0x4] sm:$0xf]
    %v140 = vld [vmem:[#allocation3 + $0x8] sm:$0xf]
    %v141 = vld [vmem:[#allocation3 + $0xc] sm:$0xf]
    %v142 = vld [vmem:[#allocation3 + $0x10] sm:$0xf]
    %v143 = vld [vmem:[#allocation3 + $0x14] sm:$0xf]
    %v144 = vld [vmem:[#allocation3 + $0x18] sm:$0xf]
    %v145 = vld [vmem:[#allocation3 + $0x1c] sm:$0xf]
    %v146 = vld [vmem:[#allocation3 + $0x20] sm:$0xf]
    %v147 = vld [vmem:[#allocation3 + $0x24] sm:$0xf]
    %v148 = vld [vmem:[#allocation3 + $0x28] sm:$0xf]
    %v149 = vld [vmem:[#allocation3 + $0x2c] sm:$0xf]
    %v150 = vld [vmem:[#allocation3 + $0x30] sm:$0xf]
    %v151 = vld [vmem:[#allocation3 + $0x34] sm:$0xf]
    %v152 = vld [vmem:[#allocation3 + $0x38] sm:$0xf]
    %v153 = vld [vmem:[#allocation3 + $0x3c] sm:$0xf]
    %v154 = vld [vmem:[#allocation6] sm:$0xf]
    %v155 = vld [vmem:[#allocation6 + $0x4] sm:$0xf]
    %v156 = vld [vmem:[#allocation6 + $0x8] sm:$0xf]
    %v157 = vld [vmem:[#allocation6 + $0xc] sm:$0xf]
    %v158 = vld [vmem:[#allocation6 + $0x10] sm:$0xf]
    %v159 = vld [vmem:[#allocation6 + $0x14] sm:$0xf]
    %v160 = vld [vmem:[#allocation6 + $0x18] sm:$0xf]
    %v161 = vld [vmem:[#allocation6 + $0x1c] sm:$0xf]
    %v162 = vld [vmem:[#allocation6 + $0x20] sm:$0xf]
    %v163 = vld [vmem:[#allocation6 + $0x24] sm:$0xf]
    %v164 = vld [vmem:[#allocation6 + $0x28] sm:$0xf]
    %v165 = vld [vmem:[#allocation6 + $0x2c] sm:$0xf]
    %v166 = vld [vmem:[#allocation6 + $0x30] sm:$0xf]
    %v167 = vld [vmem:[#allocation6 + $0x34] sm:$0xf]
    %v168 = vld [vmem:[#allocation6 + $0x38] sm:$0xf]
    %v169 = vld [vmem:[#allocation6 + $0x3c] sm:$0xf]
    %v186 = vunpack.c.l.b16 %v138
    %v187 = vunpack.c.l.b16 %v139
    %v188 = vunpack.c.l.b16 %v140
    %v189 = vunpack.c.l.b16 %v141
    %v190 = vunpack.c.l.b16 %v142
    %v191 = vunpack.c.l.b16 %v143
    %v192 = vunpack.c.l.b16 %v144
    %v193 = vunpack.c.l.b16 %v145
    %v194 = vunpack.c.l.b16 %v146
    %v195 = vunpack.c.l.b16 %v147
    %v196 = vunpack.c.l.b16 %v148
    %v197 = vunpack.c.l.b16 %v149
    %v198 = vunpack.c.l.b16 %v150
    %v199 = vunpack.c.l.b16 %v151
    %v200 = vunpack.c.l.b16 %v152
    %v201 = vunpack.c.l.b16 %v153
    %v202 = vpack.c.b16 %v187, %v186
    %v203 = vpack.c.b16 %v189, %v188
    %v204 = vpack.c.b16 %v191, %v190
    %v205 = vpack.c.b16 %v193, %v192
    %v206 = vpack.c.b16 %v195, %v194
    %v207 = vpack.c.b16 %v197, %v196
    %v208 = vpack.c.b16 %v199, %v198
    %v209 = vpack.c.b16 %v201, %v200
    %v234 = vunpack.c.l.b16 %v154
    %v235 = vunpack.c.l.b16 %v155
    %v236 = vunpack.c.l.b16 %v156
    %v237 = vunpack.c.l.b16 %v157
    %v238 = vunpack.c.l.b16 %v158
    %v239 = vunpack.c.l.b16 %v159
    %v240 = vunpack.c.l.b16 %v160
    %v241 = vunpack.c.l.b16 %v161
    %v242 = vunpack.c.l.b16 %v162
    %v243 = vunpack.c.l.b16 %v163
    %v244 = vunpack.c.l.b16 %v164
    %v245 = vunpack.c.l.b16 %v165
    %v246 = vunpack.c.l.b16 %v166
    %v247 = vunpack.c.l.b16 %v167
    %v248 = vunpack.c.l.b16 %v168
    %v249 = vunpack.c.l.b16 %v169
    %v250 = vpack.c.b16 %v235, %v234
    %v251 = vpack.c.b16 %v237, %v236
    %v252 = vpack.c.b16 %v239, %v238
    %v253 = vpack.c.b16 %v241, %v240
    %v254 = vpack.c.b16 %v243, %v242
    %v255 = vpack.c.b16 %v245, %v244
    %v256 = vpack.c.b16 %v247, %v246
    %v257 = vpack.c.b16 %v249, %v248
    %266 = vmatpush.bf16.msra.mxu0 %v257
    %267 = vmatpush.bf16.msra.mxu0 %v256
    %268 = vmatpush.bf16.msra.mxu0 %v255
    %269 = vmatpush.bf16.msra.mxu0 %v254
    %270 = vmatpush.bf16.msra.mxu0 %v253
    %271 = vmatpush.bf16.msra.mxu0 %v252
    %272 = vmatpush.bf16.msra.mxu0 %v251
    %273 = vmatpush.bf16.msra.mxu0 %v250
    %274 = vmatmul.bf16.gmra.mxu0 %v202
    %v275 = vpop.f32.mrf.mxu0
    %v276 = vadd.f32 0.0, %v275
    %v277 = vpop.f32.mrf.mxu0
    %v278 = vadd.f32 0.0, %v277
    %279 = vmatmul.bf16.gmra.mxu0 %v203
    %v280 = vpop.f32.mrf.mxu0
    %v281 = vadd.f32 0.0, %v280
    %v282 = vpop.f32.mrf.mxu0
    %v283 = vadd.f32 0.0, %v282
    %284 = vmatmul.bf16.gmra.mxu0 %v204
    %v285 = vpop.f32.mrf.mxu0
    %v286 = vadd.f32 0.0, %v285
    %v287 = vpop.f32.mrf.mxu0
    %v288 = vadd.f32 0.0, %v287
    %289 = vmatmul.bf16.gmra.mxu0 %v205
    %v290 = vpop.f32.mrf.mxu0
    %v291 = vadd.f32 0.0, %v290
    %v292 = vpop.f32.mrf.mxu0
    %v293 = vadd.f32 0.0, %v292
    %294 = vmatmul.bf16.gmra.mxu0 %v206
    %v295 = vpop.f32.mrf.mxu0
    %v296 = vadd.f32 0.0, %v295
    %v297 = vpop.f32.mrf.mxu0
    %v298 = vadd.f32 0.0, %v297
    %299 = vmatmul.bf16.gmra.mxu0 %v207
    %v300 = vpop.f32.mrf.mxu0
    %v301 = vadd.f32 0.0, %v300
    %v302 = vpop.f32.mrf.mxu0
    %v303 = vadd.f32 0.0, %v302
    %304 = vmatmul.bf16.gmra.mxu0 %v208
    %v305 = vpop.f32.mrf.mxu0
    %v306 = vadd.f32 0.0, %v305
    %v307 = vpop.f32.mrf.mxu0
    %v308 = vadd.f32 0.0, %v307
    %309 = vmatmul.bf16.gmra.mxu0 %v209
    %v310 = vpop.f32.mrf.mxu0
    %v311 = vadd.f32 0.0, %v310
    %v312 = vpop.f32.mrf.mxu0
    %v313 = vadd.f32 0.0, %v312
    %314 = vdwg.mxu0
    %v315 = vadd.f32 %v122, %v276
    %v316 = vadd.f32 %v123, %v278
    %v317 = vadd.f32 %v124, %v281
    %v318 = vadd.f32 %v125, %v283
    %v319 = vadd.f32 %v126, %v286
    %v320 = vadd.f32 %v127, %v288
    %v321 = vadd.f32 %v128, %v291
    %v322 = vadd.f32 %v129, %v293
    %v323 = vadd.f32 %v130, %v296
    %v324 = vadd.f32 %v131, %v298
    %v325 = vadd.f32 %v132, %v301
    %v326 = vadd.f32 %v133, %v303
    %v327 = vadd.f32 %v134, %v306
    %v328 = vadd.f32 %v135, %v308
    %v329 = vadd.f32 %v136, %v311
    %v330 = vadd.f32 %v137, %v313
    %331 = vst [vmem:[#allocation2] sm:$0xff] %v315
    %332 = vst [vmem:[#allocation2 + $0x8] sm:$0xff] %v316
    %333 = vst [vmem:[#allocation2 + $0x10] sm:$0xff] %v317
    %334 = vst [vmem:[#allocation2 + $0x18] sm:$0xff] %v318
    %335 = vst [vmem:[#allocation2 + $0x20] sm:$0xff] %v319
    %336 = vst [vmem:[#allocation2 + $0x28] sm:$0xff] %v320
    %337 = vst [vmem:[#allocation2 + $0x30] sm:$0xff] %v321
    %338 = vst [vmem:[#allocation2 + $0x38] sm:$0xff] %v322
    %339 = vst [vmem:[#allocation2 + $0x40] sm:$0xff] %v323
    %340 = vst [vmem:[#allocation2 + $0x48] sm:$0xff] %v324
    %341 = vst [vmem:[#allocation2 + $0x50] sm:$0xff] %v325
    %342 = vst [vmem:[#allocation2 + $0x58] sm:$0xff] %v326
    %343 = vst [vmem:[#allocation2 + $0x60] sm:$0xff] %v327
    %344 = vst [vmem:[#allocation2 + $0x68] sm:$0xff] %v328
    %345 = vst [vmem:[#allocation2 + $0x70] sm:$0xff] %v329
    %346 = vst [vmem:[#allocation2 + $0x78] sm:$0xff] %v330
    // Predicated region
    $region50: #{tpu_custom_call.1} parent=1 // pred_check
      %p347 = pneg %p102
    $region51: #{tpu_custom_call.1} parent=1 // pred_check_branch
      %349 = sbr.rel (%p347) target = $region53
    $region52: #{tpu_custom_call.1} parent=1 // pred_region
      %v350 = vld [vmem:[#allocation2] sm:$0xff]
      %v351 = vld [vmem:[#allocation2 + $0x8] sm:$0xff]
      %v352 = vld [vmem:[#allocation2 + $0x10] sm:$0xff]
      %v353 = vld [vmem:[#allocation2 + $0x18] sm:$0xff]
      %v354 = vld [vmem:[#allocation2 + $0x20] sm:$0xff]
      %v355 = vld [vmem:[#allocation2 + $0x28] sm:$0xff]
      %v356 = vld [vmem:[#allocation2 + $0x30] sm:$0xff]
      %v357 = vld [vmem:[#allocation2 + $0x38] sm:$0xff]
      %v358 = vld [vmem:[#allocation2 + $0x40] sm:$0xff]
      %v359 = vld [vmem:[#allocation2 + $0x48] sm:$0xff]
      %v360 = vld [vmem:[#allocation2 + $0x50] sm:$0xff]
      %v361 = vld [vmem:[#allocation2 + $0x58] sm:$0xff]
      %v362 = vld [vmem:[#allocation2 + $0x60] sm:$0xff]
      %v363 = vld [vmem:[#allocation2 + $0x68] sm:$0xff]
      %v364 = vld [vmem:[#allocation2 + $0x70] sm:$0xff]
      %v365 = vld [vmem:[#allocation2 + $0x78] sm:$0xff]
      %v366 = vld [vmem:[#allocation9] sm:$0xff]
      %v367 = vld [vmem:[#allocation9 + $0x8] sm:$0xff]
      %v368 = vld [vmem:[#allocation9 + $0x10] sm:$0xff]
      %v369 = vld [vmem:[#allocation9 + $0x18] sm:$0xff]
      %v370 = vld [vmem:[#allocation9 + $0x20] sm:$0xff]
      %v371 = vld [vmem:[#allocation9 + $0x28] sm:$0xff]
      %v372 = vld [vmem:[#allocation9 + $0x30] sm:$0xff]
      %v373 = vld [vmem:[#allocation9 + $0x38] sm:$0xff]
      %v374 = vld [vmem:[#allocation9 + $0x40] sm:$0xff]
      %v375 = vld [vmem:[#allocation9 + $0x48] sm:$0xff]
      %v376 = vld [vmem:[#allocation9 + $0x50] sm:$0xff]
      %v377 = vld [vmem:[#allocation9 + $0x58] sm:$0xff]
      %v378 = vld [vmem:[#allocation9 + $0x60] sm:$0xff]
      %v379 = vld [vmem:[#allocation9 + $0x68] sm:$0xff]
      %v380 = vld [vmem:[#allocation9 + $0x70] sm:$0xff]
      %v381 = vld [vmem:[#allocation9 + $0x78] sm:$0xff]
      %v382 = vld [vmem:[#allocation8] sm:$0xf]
      %v383 = vld [vmem:[#allocation8 + $0x4] sm:$0xf]
      %v384 = vld [vmem:[#allocation8 + $0x8] sm:$0xf]
      %v385 = vld [vmem:[#allocation8 + $0xc] sm:$0xf]
      %v386 = vld [vmem:[#allocation8 + $0x10] sm:$0xf]
      %v387 = vld [vmem:[#allocation8 + $0x14] sm:$0xf]
      %v388 = vld [vmem:[#allocation8 + $0x18] sm:$0xf]
      %v389 = vld [vmem:[#allocation8 + $0x1c] sm:$0xf]
      %v390 = vld [vmem:[#allocation8 + $0x20] sm:$0xf]
      %v391 = vld [vmem:[#allocation8 + $0x24] sm:$0xf]
      %v392 = vld [vmem:[#allocation8 + $0x28] sm:$0xf]
      %v393 = vld [vmem:[#allocation8 + $0x2c] sm:$0xf]
      %v394 = vld [vmem:[#allocation8 + $0x30] sm:$0xf]
      %v395 = vld [vmem:[#allocation8 + $0x34] sm:$0xf]
      %v396 = vld [vmem:[#allocation8 + $0x38] sm:$0xf]
      %v397 = vld [vmem:[#allocation8 + $0x3c] sm:$0xf]
      %v398 = vunpack.c.l.bf16 %v382
      %v399 = vunpack.c.l.bf16 %v383
      %v400 = vunpack.c.l.bf16 %v384
      %v401 = vunpack.c.l.bf16 %v385
      %v402 = vunpack.c.l.bf16 %v386
      %v403 = vunpack.c.l.bf16 %v387
      %v404 = vunpack.c.l.bf16 %v388
      %v405 = vunpack.c.l.bf16 %v389
      %v406 = vunpack.c.l.bf16 %v390
      %v407 = vunpack.c.l.bf16 %v391
      %v408 = vunpack.c.l.bf16 %v392
      %v409 = vunpack.c.l.bf16 %v393
      %v410 = vunpack.c.l.bf16 %v394
      %v411 = vunpack.c.l.bf16 %v395
      %v412 = vunpack.c.l.bf16 %v396
      %v413 = vunpack.c.l.bf16 %v397
      %v414 = vld [vmem:[#allocation11] sm:$0xff]
      %v415 = vld [vmem:[#allocation11 + $0x8] sm:$0xff]
      %v416 = vld [vmem:[#allocation11 + $0x10] sm:$0xff]
      %v417 = vld [vmem:[#allocation11 + $0x18] sm:$0xff]
      %v418 = vld [vmem:[#allocation11 + $0x20] sm:$0xff]
      %v419 = vld [vmem:[#allocation11 + $0x28] sm:$0xff]
      %v420 = vld [vmem:[#allocation11 + $0x30] sm:$0xff]
      %v421 = vld [vmem:[#allocation11 + $0x38] sm:$0xff]
      %v422 = vld [vmem:[#allocation11 + $0x40] sm:$0xff]
      %v423 = vld [vmem:[#allocation11 + $0x48] sm:$0xff]
      %v424 = vld [vmem:[#allocation11 + $0x50] sm:$0xff]
      %v425 = vld [vmem:[#allocation11 + $0x58] sm:$0xff]
      %v426 = vld [vmem:[#allocation11 + $0x60] sm:$0xff]
      %v427 = vld [vmem:[#allocation11 + $0x68] sm:$0xff]
      %v428 = vld [vmem:[#allocation11 + $0x70] sm:$0xff]
      %v429 = vld [vmem:[#allocation11 + $0x78] sm:$0xff]
      %430 = vmatpush.msra.mxu0 %v429
      %431 = vmatpush.msra.mxu0 %v428
      %432 = vmatpush.msra.mxu0 %v427
      %433 = vmatpush.msra.mxu0 %v426
      %434 = vmatpush.msra.mxu0 %v425
      %435 = vmatpush.msra.mxu0 %v424
      %436 = vmatpush.msra.mxu0 %v423
      %437 = vmatpush.msra.mxu0 %v422
      %438 = vmatpush.msra.mxu0 %v421
      %439 = vmatpush.msra.mxu0 %v420
      %440 = vmatpush.msra.mxu0 %v419
      %441 = vmatpush.msra.mxu0 %v418
      %442 = vmatpush.msra.mxu0 %v417
      %443 = vmatpush.msra.mxu0 %v416
      %444 = vmatpush.msra.mxu0 %v415
      %445 = vmatpush.msra.mxu0 %v414
      %446 = vmatmul.f32.gmra.mxu0 %v398
      %v447 = vpop.f32.mrf.mxu0
      %v448 = vadd.f32 0.0, %v447
      %449 = vmatmul.f32.gmra.mxu0 %v399
      %v450 = vpop.f32.mrf.mxu0
      %v451 = vadd.f32 0.0, %v450
      %452 = vmatmul.f32.gmra.mxu0 %v400
      %v453 = vpop.f32.mrf.mxu0
      %v454 = vadd.f32 0.0, %v453
      %455 = vmatmul.f32.gmra.mxu0 %v401
      %v456 = vpop.f32.mrf.mxu0
      %v457 = vadd.f32 0.0, %v456
      %458 = vmatmul.f32.gmra.mxu0 %v402
      %v459 = vpop.f32.mrf.mxu0
      %v460 = vadd.f32 0.0, %v459
      %461 = vmatmul.f32.gmra.mxu0 %v403
      %v462 = vpop.f32.mrf.mxu0
      %v463 = vadd.f32 0.0, %v462
      %464 = vmatmul.f32.gmra.mxu0 %v404
      %v465 = vpop.f32.mrf.mxu0
      %v466 = vadd.f32 0.0, %v465
      %467 = vmatmul.f32.gmra.mxu0 %v405
      %v468 = vpop.f32.mrf.mxu0
      %v469 = vadd.f32 0.0, %v468
      %470 = vmatmul.f32.gmra.mxu0 %v406
      %v471 = vpop.f32.mrf.mxu0
      %v472 = vadd.f32 0.0, %v471
      %473 = vmatmul.f32.gmra.mxu0 %v407
      %v474 = vpop.f32.mrf.mxu0
      %v475 = vadd.f32 0.0, %v474
      %476 = vmatmul.f32.gmra.mxu0 %v408
      %v477 = vpop.f32.mrf.mxu0
      %v478 = vadd.f32 0.0, %v477
      %479 = vmatmul.f32.gmra.mxu0 %v409
      %v480 = vpop.f32.mrf.mxu0
      %v481 = vadd.f32 0.0, %v480
      %482 = vmatmul.f32.gmra.mxu0 %v410
      %v483 = vpop.f32.mrf.mxu0
      %v484 = vadd.f32 0.0, %v483
      %485 = vmatmul.f32.gmra.mxu0 %v411
      %v486 = vpop.f32.mrf.mxu0
      %v487 = vadd.f32 0.0, %v486
      %488 = vmatmul.f32.gmra.mxu0 %v412
      %v489 = vpop.f32.mrf.mxu0
      %v490 = vadd.f32 0.0, %v489
      %491 = vmatmul.f32.gmra.mxu0 %v413
      %v492 = vpop.f32.mrf.mxu0
      %v493 = vadd.f32 0.0, %v492
      %494 = vdwg.mxu0
      %495 = vmatpush.msra.mxu0 %v381
      %496 = vmatpush.msra.mxu0 %v380
      %497 = vmatpush.msra.mxu0 %v379
      %498 = vmatpush.msra.mxu0 %v378
      %499 = vmatpush.msra.mxu0 %v377
      %500 = vmatpush.msra.mxu0 %v376
      %501 = vmatpush.msra.mxu0 %v375
      %502 = vmatpush.msra.mxu0 %v374
      %503 = vmatpush.msra.mxu0 %v373
      %504 = vmatpush.msra.mxu0 %v372
      %505 = vmatpush.msra.mxu0 %v371
      %506 = vmatpush.msra.mxu0 %v370
      %507 = vmatpush.msra.mxu0 %v369
      %508 = vmatpush.msra.mxu0 %v368
      %509 = vmatpush.msra.mxu0 %v367
      %510 = vmatpush.msra.mxu0 %v366
      %511 = vmatmul.f32.gmra.mxu0 %v350
      %v512 = vpop.f32.mrf.mxu0
      %v513 = vadd.f32 %v448, %v512
      %514 = vmatmul.f32.gmra.mxu0 %v351
      %v515 = vpop.f32.mrf.mxu0
      %v516 = vadd.f32 %v451, %v515
      %517 = vmatmul.f32.gmra.mxu0 %v352
      %v518 = vpop.f32.mrf.mxu0
      %v519 = vadd.f32 %v454, %v518
      %520 = vmatmul.f32.gmra.mxu0 %v353
      %v521 = vpop.f32.mrf.mxu0
      %v522 = vadd.f32 %v457, %v521
      %523 = vmatmul.f32.gmra.mxu0 %v354
      %v524 = vpop.f32.mrf.mxu0
      %v525 = vadd.f32 %v460, %v524
      %526 = vmatmul.f32.gmra.mxu0 %v355
      %v527 = vpop.f32.mrf.mxu0
      %v528 = vadd.f32 %v463, %v527
      %529 = vmatmul.f32.gmra.mxu0 %v356
      %v530 = vpop.f32.mrf.mxu0
      %v531 = vadd.f32 %v466, %v530
      %532 = vmatmul.f32.gmra.mxu0 %v357
      %v533 = vpop.f32.mrf.mxu0
      %v534 = vadd.f32 %v469, %v533
      %535 = vmatmul.f32.gmra.mxu0 %v358
      %v536 = vpop.f32.mrf.mxu0
      %v537 = vadd.f32 %v472, %v536
      %538 = vmatmul.f32.gmra.mxu0 %v359
      %v539 = vpop.f32.mrf.mxu0
      %v540 = vadd.f32 %v475, %v539
      %541 = vmatmul.f32.gmra.mxu0 %v360
      %v542 = vpop.f32.mrf.mxu0
      %v543 = vadd.f32 %v478, %v542
      %544 = vmatmul.f32.gmra.mxu0 %v361
      %v545 = vpop.f32.mrf.mxu0
      %v546 = vadd.f32 %v481, %v545
      %547 = vmatmul.f32.gmra.mxu0 %v362
      %v548 = vpop.f32.mrf.mxu0
      %v549 = vadd.f32 %v484, %v548
      %550 = vmatmul.f32.gmra.mxu0 %v363
      %v551 = vpop.f32.mrf.mxu0
      %v552 = vadd.f32 %v487, %v551
      %553 = vmatmul.f32.gmra.mxu0 %v364
      %v554 = vpop.f32.mrf.mxu0
      %v555 = vadd.f32 %v490, %v554
      %556 = vmatmul.f32.gmra.mxu0 %v365
      %v557 = vpop.f32.mrf.mxu0
      %v558 = vadd.f32 %v493, %v557
      %559 = vdwg.mxu0
      %v560 = vld [vmem:[%s5] sm:$0x1]
      %v562 = vperm.slane %v560, 0
      %v564 = vadd.f32 %v513, %v562
      %v565 = vadd.f32 %v516, %v562
      %v566 = vadd.f32 %v519, %v562
      %v567 = vadd.f32 %v522, %v562
      %v568 = vadd.f32 %v525, %v562
      %v569 = vadd.f32 %v528, %v562
      %v570 = vadd.f32 %v531, %v562
      %v571 = vadd.f32 %v534, %v562
      %v572 = vadd.f32 %v537, %v562
      %v573 = vadd.f32 %v540, %v562
      %v574 = vadd.f32 %v543, %v562
      %v575 = vadd.f32 %v546, %v562
      %v576 = vadd.f32 %v549, %v562
      %v577 = vadd.f32 %v552, %v562
      %v578 = vadd.f32 %v555, %v562
      %v579 = vadd.f32 %v558, %v562
      %v580 = vmax.f32 %v564, 0.0
      %v581 = vmax.f32 %v565, 0.0
      %v582 = vmax.f32 %v566, 0.0
      %v583 = vmax.f32 %v567, 0.0
      %v584 = vmax.f32 %v568, 0.0
      %v585 = vmax.f32 %v569, 0.0
      %v586 = vmax.f32 %v570, 0.0
      %v587 = vmax.f32 %v571, 0.0
      %v588 = vmax.f32 %v572, 0.0
      %v589 = vmax.f32 %v573, 0.0
      %v590 = vmax.f32 %v574, 0.0
      %v591 = vmax.f32 %v575, 0.0
      %v592 = vmax.f32 %v576, 0.0
      %v593 = vmax.f32 %v577, 0.0
      %v594 = vmax.f32 %v578, 0.0
      %v595 = vmax.f32 %v579, 0.0
      %v596 = vpack.c.bf16 %v580, %v580
      %v597 = vpack.c.bf16 %v581, %v581
      %v598 = vpack.c.bf16 %v582, %v582
      %v599 = vpack.c.bf16 %v583, %v583
      %v600 = vpack.c.bf16 %v584, %v584
      %v601 = vpack.c.bf16 %v585, %v585
      %v602 = vpack.c.bf16 %v586, %v586
      %v603 = vpack.c.bf16 %v587, %v587
      %v604 = vpack.c.bf16 %v588, %v588
      %v605 = vpack.c.bf16 %v589, %v589
      %v606 = vpack.c.bf16 %v590, %v590
      %v607 = vpack.c.bf16 %v591, %v591
      %v608 = vpack.c.bf16 %v592, %v592
      %v609 = vpack.c.bf16 %v593, %v593
      %v610 = vpack.c.bf16 %v594, %v594
      %v611 = vpack.c.bf16 %v595, %v595
      %612 = vst [vmem:[#allocation12] sm:$0xf] %v596
      %613 = vst [vmem:[#allocation12 + $0x4] sm:$0xf] %v597
      %614 = vst [vmem:[#allocation12 + $0x8] sm:$0xf] %v598
      %615 = vst [vmem:[#allocation12 + $0xc] sm:$0xf] %v599
      %616 = vst [vmem:[#allocation12 + $0x10] sm:$0xf] %v600
      %617 = vst [vmem:[#allocation12 + $0x14] sm:$0xf] %v601
      %618 = vst [vmem:[#allocation12 + $0x18] sm:$0xf] %v602
      %619 = vst [vmem:[#allocation12 + $0x1c] sm:$0xf] %v603
      %620 = vst [vmem:[#allocation12 + $0x20] sm:$0xf] %v604
      %621 = vst [vmem:[#allocation12 + $0x24] sm:$0xf] %v605
      %622 = vst [vmem:[#allocation12 + $0x28] sm:$0xf] %v606
      %623 = vst [vmem:[#allocation12 + $0x2c] sm:$0xf] %v607
      %624 = vst [vmem:[#allocation12 + $0x30] sm:$0xf] %v608
      %625 = vst [vmem:[#allocation12 + $0x34] sm:$0xf] %v609
      %626 = vst [vmem:[#allocation12 + $0x38] sm:$0xf] %v610
      %627 = vst [vmem:[#allocation12 + $0x3c] sm:$0xf] %v611
    $region53: #{tpu_custom_call.1} parent=1 // pred_fallthru
      _
    // Predicated region
    $region54: #{tpu_custom_call.1} parent=1 // pred_check
      _
    $region55: #{tpu_custom_call.1} parent=1 // pred_check_branch
      %629 = sbr.rel (0) target = $region57
    $region56: #{tpu_custom_call.1} parent=1 // pred_region
      %631 = vsyncadd [#allocation5], 0
      %s632 = sshll.u32 [#allocation12], 4
      %s633 = int_to_ptr.vmem [resolvable:$true] %s632
      %s634 = sshll.u32 %s6, 4
      %s635 = int_to_ptr.hbm [resolvable:$true] %s634
      %640 = dma.vmem_to_hbm [thread:$0]  %s633, 1024, %s635, [#allocation5], 64, 64, 4
    $region57: #{tpu_custom_call.1} parent=1 // pred_fallthru
      _
    // Predicated region
    $region58: #{tpu_custom_call.1} parent=1 // pred_check
      _
    $region59: #{tpu_custom_call.1} parent=1 // pred_check_branch
      %642 = sbr.rel (0) target = $region61
    $region60: #{tpu_custom_call.1} parent=1 // pred_region
      %644 = dma.done [#allocation5], 1024
    $region61: #{tpu_custom_call.1} parent=1 // pred_fallthru
      _
    %645 = vsyncpa [#allocation4], 1
    %646 = vsyncpa [#allocation7], 1
    %647 = vsyncpa [#allocation10], 1
    %648 = vsyncpa [#allocation5], 1

</llo_original>
